<compile_context>
chip_gen: v5e
topology: v5e:2x2
jax: 0.10.0
libtpu: 0.0.40
codegen_flags: <defaults>
</compile_context>

<pallas_src>
import functools

import numpy as np
import jax
import jax.numpy as jnp
from jax.experimental import pallas as pl
from jax.experimental.pallas import tpu as pltpu

_LANES = 512            # lane-dense last dim (multiple of 128 -> unmasked vst)
_MAX_BLOCK_ROWS = 512   # (512, 512) f32 = 1 MiB per buffer per array


def _gaussian_noise_kernel(x_ref, bits_ref, o_ref, *, stddev):
    """Box-Muller on uint32 bits -> N(0, stddev^2) noise, fused add with x."""
    bits = bits_ref[...]
    half = bits.shape[-1] // 2
    b1 = bits[:, :half]
    b2 = bits[:, half:]

    # Top 24 bits -> uniforms. u1 in (0, 1] (avoids log(0)), u2 in [0, 1).
    inv24 = jnp.float32(1.0 / 16777216.0)
    u1 = ((b1 >> 8).astype(jnp.float32) + 1.0) * inv24
    u2 = (b2 >> 8).astype(jnp.float32) * inv24

    # Box-Muller: use BOTH outputs; fold stddev into the radius once.
    r = jnp.float32(stddev) * jnp.sqrt(-2.0 * jnp.log(u1))
    theta = jnp.float32(2.0 * np.pi) * u2
    noise = jnp.concatenate([r * jnp.cos(theta), r * jnp.sin(theta)], axis=-1)

    o_ref[...] = x_ref[...] + noise


def gaussian_noise(x, stddev, key, training=True):
    """Pallas implementation of GaussianNoise.forward (NCHW float input)."""
    if not training:
        return x  # eval mode: identity, exactly as the PyTorch module.

    orig_shape = x.shape
    orig_dtype = x.dtype
    n = x.size

    # Lane-dense slab: (rows, _LANES), rows a multiple of the row-tile size.
    rows = -(-n // _LANES)
    rows = -(-rows // 8) * 8                       # sublane multiple of 8
    block_rows = min(_MAX_BLOCK_ROWS, rows)        # multiple of 8 by construction
    rows = -(-rows // block_rows) * block_rows     # rows divisible by block_rows
    padded = rows * _LANES

    x_flat = jnp.ravel(x).astype(jnp.float32)
    x2 = jnp.pad(x_flat, (0, padded - n)).reshape(rows, _LANES)
    bits = jax.random.bits(key, (rows, _LANES), dtype=jnp.uint32)

    grid = (rows // block_rows,)
    spec = pl.BlockSpec((block_rows, _LANES), lambda i: (i, 0))

    out = pl.pallas_call(
        functools.partial(_gaussian_noise_kernel, stddev=float(stddev)),
        out_shape=jax.ShapeDtypeStruct((rows, _LANES), jnp.float32),
        grid=grid,
        in_specs=[spec, spec],
        out_specs=spec,
        input_output_aliases={0: 0},               # write noise in-place over x slab
        compiler_params=pltpu.CompilerParams(
            dimension_semantics=("parallel",)),
    )(x2, bits)

    return out.reshape(-1)[:n].reshape(orig_shape).astype(orig_dtype)


if __name__ == "__main__":
    key = jax.random.PRNGKey(0)
    kx, knoise = jax.random.split(key)
    x = jax.random.normal(kx, (2, 4, 16, 16), dtype=jnp.float32)
    stddev = 0.1

    # Training mode: x + noise via the Pallas kernel.
    y_train = jax.block_until_ready(gaussian_noise(x, stddev, knoise, training=True))
    # Eval mode: identity.
    y_eval = jax.block_until_ready(gaussian_noise(x, stddev, knoise, training=False))

    assert y_train.shape == x.shape and y_train.dtype == x.dtype
    assert bool(jnp.all(jnp.isfinite(y_train)))
    assert bool(jnp.all(y_eval == x))

    noise = y_train - x
    assert float(jnp.max(jnp.abs(noise))) > 0.0          # noise actually applied
    assert abs(float(jnp.mean(noise))) < 0.05             # mean ~ 0
    assert 0.03 < float(jnp.std(noise)) < 0.3              # std ~ stddev

    print("KERNEL_OK")
</pallas_src>

<mosaic_0001>
module attributes {stable_mosaic.version = 11 : i64} {
  func.func @_gaussian_noise_kernel(%arg0: i32, %arg1: memref<8x512xf32, #tpu.memory_space<vmem>>, %arg2: memref<8x512xi32, #tpu.memory_space<vmem>>, %arg3: memref<8x512xf32, #tpu.memory_space<vmem>>) attributes {dimension_semantics = [#tpu.dimension_semantics<parallel>], iteration_bounds = array<i64: 1>, scalar_prefetch = 0 : i64, scratch_operands = 0 : i64, tpu.core_type = #tpu.core_type<tc>, window_params = [{transform_indices = @transform_0, window_bounds = array<i64: 8, 512>}, {transform_indices = @transform_1, window_bounds = array<i64: 8, 512>}, {transform_indices = @transform_2, window_bounds = array<i64: 8, 512>}]} {
    %c0 = arith.constant 0 : index
    %c0_0 = arith.constant 0 : index
    %0 = vector.load %arg2[%c0, %c0_0] : memref<8x512xi32, #tpu.memory_space<vmem>>, vector<8x512xi32>
    %1 = vector.extract_strided_slice %0 {offsets = [0, 0], sizes = [8, 256], strides = [1, 1]} : vector<8x512xi32> to vector<8x256xi32>
    %2 = vector.extract_strided_slice %0 {offsets = [0, 256], sizes = [8, 256], strides = [1, 1]} : vector<8x512xi32> to vector<8x256xi32>
    %c8_i32 = arith.constant 8 : i32
    %3 = vector.broadcast %c8_i32 : i32 to vector<8x256xi32>
    %4 = arith.shrui %1, %3 : vector<8x256xi32>
    %5 = arith.uitofp %4 : vector<8x256xi32> to vector<8x256xf32>
    %cst = arith.constant 1.000000e+00 : f32
    %6 = vector.broadcast %cst : f32 to vector<8x256xf32>
    %7 = arith.addf %5, %6 : vector<8x256xf32>
    %cst_1 = arith.constant 5.96046448E-8 : f32
    %8 = vector.broadcast %cst_1 : f32 to vector<8x256xf32>
    %9 = arith.mulf %7, %8 : vector<8x256xf32>
    %c8_i32_2 = arith.constant 8 : i32
    %10 = vector.broadcast %c8_i32_2 : i32 to vector<8x256xi32>
    %11 = arith.shrui %2, %10 : vector<8x256xi32>
    %12 = arith.uitofp %11 : vector<8x256xi32> to vector<8x256xf32>
    %cst_3 = arith.constant 5.96046448E-8 : f32
    %13 = vector.broadcast %cst_3 : f32 to vector<8x256xf32>
    %14 = arith.mulf %12, %13 : vector<8x256xf32>
    %15 = math.log %9 : vector<8x256xf32>
    %cst_4 = arith.constant -2.000000e+00 : f32
    %16 = vector.broadcast %cst_4 : f32 to vector<8x256xf32>
    %17 = arith.mulf %16, %15 : vector<8x256xf32>
    %18 = math.sqrt %17 : vector<8x256xf32>
    %cst_5 = arith.constant 1.000000e-01 : f32
    %19 = vector.broadcast %cst_5 : f32 to vector<8x256xf32>
    %20 = arith.mulf %19, %18 : vector<8x256xf32>
    %cst_6 = arith.constant 6.28318548 : f32
    %21 = vector.broadcast %cst_6 : f32 to vector<8x256xf32>
    %22 = arith.mulf %21, %14 : vector<8x256xf32>
    %23 = math.cos %22 : vector<8x256xf32>
    %24 = arith.mulf %20, %23 : vector<8x256xf32>
    %25 = math.sin %22 : vector<8x256xf32>
    %26 = arith.mulf %20, %25 : vector<8x256xf32>
    %27 = tpu.concatenate %24, %26 in 1 : vector<8x256xf32>, vector<8x256xf32> -> vector<8x512xf32>
    %c0_7 = arith.constant 0 : index
    %c0_8 = arith.constant 0 : index
    %28 = vector.load %arg1[%c0_7, %c0_8] : memref<8x512xf32, #tpu.memory_space<vmem>>, vector<8x512xf32>
    %29 = arith.addf %28, %27 : vector<8x512xf32>
    %c0_9 = arith.constant 0 : index
    %c0_10 = arith.constant 0 : index
    %30 = vector.load %arg3[%c0_9, %c0_10] : memref<8x512xf32, #tpu.memory_space<vmem>>, vector<8x512xf32>
    tpu.vector_store %arg3[%c0_9, %c0_10], %29 {strides = array<i32>} : memref<8x512xf32, #tpu.memory_space<vmem>>, vector<8x512xf32>,
    return
  }
  func.func @transform_0(%arg0: i32) -> (i32, i32) {
    %c0_i32 = arith.constant 0 : i32
    %c0_i32_0 = arith.constant 0 : i32
    return %arg0, %c0_i32 : i32, i32
  }
  func.func @transform_1(%arg0: i32) -> (i32, i32) {
    %c0_i32 = arith.constant 0 : i32
    %c0_i32_0 = arith.constant 0 : i32
    return %arg0, %c0_i32 : i32, i32
  }
  func.func @transform_2(%arg0: i32) -> (i32, i32) {
    %c0_i32 = arith.constant 0 : i32
    %c0_i32_0 = arith.constant 0 : i32
    return %arg0, %c0_i32 : i32, i32
  }
}

</mosaic_0001>

<llo_original>
// kernel: tpu_custom_call.1
$region0: #{tpu_custom_call.1}
  #allocation0 [shape = 'u32[]', space=smem, size = 0x4, offset = 0x4, fixed_abs, tag = 'smem constant byte address 0x4 - core index']
  #allocation1 [shape = 'u32[72,128]{1,0:T(1,128)}', space=vmem, size = 0x9000, scoped, tag = 'internal scratch']
  %s0 = inlined_call_operand.hbm [shape: f32[8,512], index: 0, kind: input, shape index: {}, may-alias: {0,2}]
  %s1 = inlined_call_operand.vmem [shape: u32[8,512], index: 1, kind: input, shape index: {}]
  %s2 = inlined_call_operand.hbm [shape: f32[8,512], index: 2, kind: output, shape index: {}, may-alias: {0,2}]
  %s3 = sld [smem:[#allocation0]]
  $region22: #{tpu_custom_call.1} parent=0
    _
  %s5 = ssub.s32 1, %s3
  %s6 = scalar_select 0, %s5, %s3
  $region1: #{tpu_custom_call.1} parent=0
    #allocation2 [shape = 'u8[16384]{0}', space=vmem, size = 0x4000, scoped, tag = 'input window, operand 0, single buffered']
    #allocation3 [shape = 's32[1]{0}', space=sflag, size = 0x4, scoped, tag = 'scoped memory for tpu_custom_call.1']
    #allocation4 [shape = 's32[1]{0}', space=sflag, size = 0x4, scoped, tag = 'scoped memory for tpu_custom_call.1']
    #allocation5 [shape = 'u8[16384]{0}', space=vmem, size = 0x4000, scoped, tag = 'output window, operand 0, single buffered']
    %7 = vsyncpa [#allocation3], 0
    %8 = vsyncpa [#allocation4], 0
    // Predicated region
    $region2: #{tpu_custom_call.1} parent=1 // pred_check
      _
    $region3: #{tpu_custom_call.1} parent=1 // pred_check_branch
      %10 = sbr.rel (0) target = $region5
    $region4: #{tpu_custom_call.1} parent=1 // pred_region
      %12 = vsyncadd [#allocation3], 0
      %s14 = sshll.u32 %s0, 4
      %s15 = int_to_ptr.hbm [resolvable:$true] %s14
      %s16 = sshll.u32 [#allocation2], 4
      %s17 = int_to_ptr.vmem [resolvable:$true] %s16
      %19 = dma.hbm_to_vmem [thread:$0]  %s15, 512, %s17, [#allocation3]
    $region5: #{tpu_custom_call.1} parent=1 // pred_fallthru
      _
    // Predicated region
    $region6: #{tpu_custom_call.1} parent=1 // pred_check
      _
    $region7: #{tpu_custom_call.1} parent=1 // pred_check_branch
      %21 = sbr.rel (0) target = $region9
    $region8: #{tpu_custom_call.1} parent=1 // pred_region
      _
    $region9: #{tpu_custom_call.1} parent=1 // pred_fallthru
      _
    // Predicated region
    $region10: #{tpu_custom_call.1} parent=1 // pred_check
      _
    $region11: #{tpu_custom_call.1} parent=1 // pred_check_branch
      %23 = sbr.rel (0) target = $region13
    $region12: #{tpu_custom_call.1} parent=1 // pred_region
      %25 = dma.done [#allocation3], 512
    $region13: #{tpu_custom_call.1} parent=1 // pred_fallthru
      _
    %v26 = vld [vmem:[%s1] sm:$0xff]
    %v27 = vld [vmem:[%s1 + $0x8] sm:$0xff]
    %v28 = vld [vmem:[%s1 + $0x10] sm:$0xff]
    %v29 = vld [vmem:[%s1 + $0x18] sm:$0xff]
    %v30 = vshrl.u32 %v26, 8
    %v31 = vshrl.u32 %v27, 8
    %v32 = vshrl.u32 %v30, 16
    %v33 = vand.u32 %v30, 65535
    %v34 = vcvt.s32.f32 %v32
    %v35 = vmul.f32 %v34, 65536.0
    %v36 = vcvt.s32.f32 %v33
    %v37 = vadd.f32 %v35, %v36
    %v38 = vshrl.u32 %v31, 16
    %v39 = vand.u32 %v31, 65535
    %v40 = vcvt.s32.f32 %v38
    %v41 = vmul.f32 %v40, 65536.0
    %v42 = vcvt.s32.f32 %v39
    %v43 = vadd.f32 %v41, %v42
    %v44 = vadd.f32 %v37, 1.0
    %v45 = vadd.f32 %v43, 1.0
    %v46 = vmul.f32 %v44, 5.9604645e-08
    %v47 = vmul.f32 %v45, 5.9604645e-08
    %v48 = vshrl.u32 %v28, 8
    %v49 = vshrl.u32 %v29, 8
    %v50 = vshrl.u32 %v48, 16
    %v51 = vand.u32 %v48, 65535
    %v52 = vcvt.s32.f32 %v50
    %v53 = vmul.f32 %v52, 65536.0
    %v54 = vcvt.s32.f32 %v51
    %v55 = vadd.f32 %v53, %v54
    %v56 = vshrl.u32 %v49, 16
    %v57 = vand.u32 %v49, 65535
    %v58 = vcvt.s32.f32 %v56
    %v59 = vmul.f32 %v58, 65536.0
    %v60 = vcvt.s32.f32 %v57
    %v61 = vadd.f32 %v59, %v60
    %v62 = vmul.f32 %v55, 5.9604645e-08
    %v63 = vmul.f32 %v61, 5.9604645e-08
    %v64 = vlog2.pop %v46
    %v65 = vmul.f32 %v64, 0.6931472
    %v66 = vlog2.pop %v47
    %v67 = vmul.f32 %v66, 0.6931472
    %v68 = vmul.f32 %v65, -2.0
    %v69 = vmul.f32 %v67, -2.0
    %v70 = vrsqrt.pop %v68
    %v71 = vmul.f32 %v70, %v68
    %v72 = vmul.f32 %v71, %v70
    %v73 = vmul.f32 0.5, %v72
    %v74 = vsub.f32 1.5, %v73
    %v75 = vmul.f32 %v70, %v74
    %v76 = vmul.f32 %v68, %v75
    %vm77 = vcmp.eq.f32.partialorder %v68, inf
    %v78 = vsel %vm77, %v68, %v76
    %vm79 = vcmp.eq.f32.partialorder %v68, 0.0
    %v80 = vand.u32 %v68, 2147483648
    %v81 = vsel %vm79, %v80, %v78
    %v82 = vrsqrt.pop %v69
    %v83 = vmul.f32 %v82, %v69
    %v84 = vmul.f32 %v83, %v82
    %v85 = vmul.f32 0.5, %v84
    %v86 = vsub.f32 1.5, %v85
    %v87 = vmul.f32 %v82, %v86
    %v88 = vmul.f32 %v69, %v87
    %vm89 = vcmp.eq.f32.partialorder %v69, inf
    %v90 = vsel %vm89, %v69, %v88
    %vm91 = vcmp.eq.f32.partialorder %v69, 0.0
    %v92 = vand.u32 %v69, 2147483648
    %v93 = vsel %vm91, %v92, %v90
    %v94 = vmul.f32 %v81, 0.1
    %v95 = vmul.f32 %v93, 0.1
    %v96 = vmul.f32 %v62, 6.2831855
    %v97 = vmul.f32 %v63, 6.2831855
    %v98 = vand.u32 2147483647, %v96
    %vm99 = vcmp.le.f32.partialorder %v98, 0.7853982
    %vm100 = vcmp.lt.s32.totalorder %v96, 0
    %v101 = vand.u32 %v96, 2139095040
    %v102 = vshrl.u32 %v101, 23
    %v103 = vsub.s32 %v102, 127
    %v104 = vand.u32 2147483647, %v96
    %v105 = vand.u32 %v104, 8388607
    %v106 = vor.u32 %v105, 8388608
    %v107 = vsub.s32 0, %v106
    %v108 = vadd.s32 %v103, 1
    %vm109 = vcmp.gt.s32.totalorder %v108, 0
    %v110 = vsel %vm109, %v108, 0
    %v111 = vshrl.u32 %v110, 5
    %v112 = vand.u32 %v110, 31
    %v113 = vsub.s32 32, %v112
    %v114 = vshrl.u32 683565275, %v113
    %v115 = vshll.u32 683565275, %v112
    %v116 = vshrl.u32 2475754826, %v113
    %v117 = vor.u32 %v115, %v116
    %v118 = vshll.u32 2475754826, %v112
    %v119 = vshrl.u32 2131351028, %v113
    %v120 = vor.u32 %v118, %v119
    %v121 = vshll.u32 2131351028, %v112
    %v122 = vshrl.u32 2102212464, %v113
    %v123 = vor.u32 %v121, %v122
    %v124 = vshll.u32 2102212464, %v112
    %v125 = vshrl.u32 920167782, %v113
    %v126 = vor.u32 %v124, %v125
    %v127 = vshll.u32 920167782, %v112
    %v128 = vshrl.u32 1326507024, %v113
    %v129 = vor.u32 %v127, %v128
    %vm130 = vcmp.lt.s32.totalorder %v111, 1
    %vm131 = vcmp.lt.s32.totalorder %v111, 2
    %vm132 = vcmp.lt.s32.totalorder %v111, 3
    %vm133 = vcmp.lt.s32.totalorder %v111, 4
    %v134 = vsel %vm130, %v114, %v117
    %v135 = vsel %vm133, %v123, 2102212464
    %v136 = vsel %vm132, %v120, %v135
    %v137 = vsel %vm131, %v134, %v136
    %v138 = vsel %vm130, %v117, %v120
    %v139 = vsel %vm133, %v126, 920167782
    %v140 = vsel %vm132, %v123, %v139
    %v141 = vsel %vm131, %v138, %v140
    %v142 = vsel %vm130, %v120, %v123
    %v143 = vsel %vm133, %v129, 1326507024
    %v144 = vsel %vm132, %v126, %v143
    %v145 = vsel %vm131, %v142, %v144
    %v146 = vshll.u32 %v106, 8
    %v147 = vand.u32 %v146, 65535
    %v148 = vshrl.u32 %v146, 16
    %v149 = vand.u32 %v145, 65535
    %v150 = vshrl.u32 %v145, 16
    %v151 = vmul.u32 %v147, %v149
    %v152 = vmul.u32 %v147, %v150
    %v153 = vmul.u32 %v148, %v149
    %v154 = vmul.u32 %v148, %v150
    %v155 = vshll.u32 %v152, 16
    %v156 = vshrl.u32 %v152, 16
    %v157 = vshll.u32 %v153, 16
    %v158 = vshrl.u32 %v153, 16
    %vm159 = vc.u32 %v151, %v155
    %v160 = vsel %vm159, 1, 0
    %v161 = vadd.s32 %v151, %v155
    %v162 = vadd.s32 %v154, %v160
    %vm163 = vc.u32 %v161, %v157
    %v164 = vsel %vm163, 1, 0
    %v165 = vadd.s32 %v161, %v157
    %v166 = vadd.s32 %v162, %v164
    %v167 = vadd.s32 %v166, %v156
    %v168 = vadd.s32 %v167, %v158
    %v169 = vand.u32 %v146, 65535
    %v170 = vshrl.u32 %v146, 16
    %v171 = vand.u32 %v141, 65535
    %v172 = vshrl.u32 %v141, 16
    %v173 = vmul.u32 %v169, %v171
    %v174 = vmul.u32 %v169, %v172
    %v175 = vmul.u32 %v170, %v171
    %v176 = vmul.u32 %v170, %v172
    %v177 = vshll.u32 %v174, 16
    %v178 = vshrl.u32 %v174, 16
    %v179 = vshll.u32 %v175, 16
    %v180 = vshrl.u32 %v175, 16
    %vm181 = vc.u32 %v173, %v177
    %v182 = vsel %vm181, 1, 0
    %v183 = vadd.s32 %v173, %v177
    %v184 = vadd.s32 %v176, %v182
    %vm185 = vc.u32 %v183, %v179
    %v186 = vsel %vm185, 1, 0
    %v187 = vadd.s32 %v183, %v179
    %v188 = vadd.s32 %v184, %v186
    %v189 = vadd.s32 %v188, %v178
    %v190 = vadd.s32 %v189, %v180
    %v191 = vmul.u32 %v146, %v137
    %v192 = vadd.s32 %v168, %v187
    %vm193 = vc.u32 %v168, %v187
    %v194 = vadd.s32 %v190, 1
    %v195 = vsel %vm193, %v194, %v190
    %v196 = vadd.s32 %v191, %v195
    %v197 = vadd.s32 %v196, 536870912
    %v198 = vshrl.u32 %v197, 30
    %v199 = vshll.u32 %v198, 30
    %v200 = vsub.s32 %v196, %v199
    %vm201 = vcmp.lt.s32.totalorder %v200, 0
    %v202 = vsub.s32 0, %v200
    %v203 = vsel %vm201, %v202, %v200
    %v204 = vclz %v203
    %v205 = vsub.s32 %v204, 2
    %vm206 = vcmp.gt.s32.totalorder 0, %v205
    %v207 = vsel %vm206, 0, %v205
    %v208 = vsub.s32 32, %v207
    %v209 = vshll.u32 %v200, %v207
    %v210 = vshrl.u32 %v192, %v208
    %v211 = vor.u32 %v209, %v210
    %v212 = vsub.s32 4294967266, %v207
    %v213 = vadd.s32 %v212, 127
    %v214 = vshll.u32 %v213, 23
    %v215 = vor.u32 4788187, %v214
    %v216 = vand.u32 2147483647, %v215
    %v218 = vcvt.s32.f32 %v211
    %v219 = vmul.f32 %v218, %v216
    %v220 = vxor.u32 %v219, 2147483648
    %v221 = vsel %vm100, %v220, %v219
    %v222 = vsub.s32 4, %v198
    %v223 = vsel %vm100, %v222, %v198
    %v224 = vsel %vm99, %v96, %v221
    %v225 = vsel %vm99, 0, %v223
    %v226 = vmul.f32 %v224, %v224
    %v227 = vmul.f32 %v226, -0.001358992
    %v228 = vadd.f32 %v227, 0.041655596
    %v229 = vmul.f32 %v226, %v228
    %v230 = vadd.f32 %v229, -0.4999988
    %v231 = vmul.f32 %v226, %v230
    %v232 = vadd.f32 1.0, %v231
    %v233 = vmul.f32 %v224, %v224
    %v234 = vmul.f32 %v233, -0.00019511016
    %v235 = vadd.f32 %v234, 0.008332121
    %v236 = vmul.f32 %v233, %v235
    %v237 = vadd.f32 %v236, -0.16666654
    %v238 = vmul.f32 %v233, %v237
    %v239 = vadd.f32 %v238, 1.0
    %v240 = vmul.f32 %v239, %v224
    %vm241 = vweird.f32 %v96
    %v242 = vand.u32 %v225, 3
    %vm243 = vcmp.lt.s32.totalorder %v242, 2
    %vm244 = vcmp.eq.s32.totalorder %v242, 0
    %v245 = vxor.u32 %v240, 2147483648
    %v246 = vsel %vm244, %v232, %v245
    %vm247 = vcmp.eq.s32.totalorder %v242, 2
    %v248 = vxor.u32 %v232, 2147483648
    %v249 = vsel %vm247, %v248, %v240
    %v250 = vsel %vm243, %v246, %v249
    %v251 = vsel %vm241, nan, %v250
    %v252 = vand.u32 2147483647, %v97
    %vm253 = vcmp.le.f32.partialorder %v252, 0.7853982
    %vm254 = vcmp.lt.s32.totalorder %v97, 0
    %v255 = vand.u32 %v97, 2139095040
    %v256 = vshrl.u32 %v255, 23
    %v257 = vsub.s32 %v256, 127
    %v258 = vand.u32 2147483647, %v97
    %v259 = vand.u32 %v258, 8388607
    %v260 = vor.u32 %v259, 8388608
    %v261 = vsub.s32 0, %v260
    %v262 = vadd.s32 %v257, 1
    %vm263 = vcmp.gt.s32.totalorder %v262, 0
    %v264 = vsel %vm263, %v262, 0
    %v265 = vshrl.u32 %v264, 5
    %v266 = vand.u32 %v264, 31
    %v267 = vsub.s32 32, %v266
    %v268 = vshrl.u32 683565275, %v267
    %v269 = vshll.u32 683565275, %v266
    %v270 = vshrl.u32 2475754826, %v267
    %v271 = vor.u32 %v269, %v270
    %v272 = vshll.u32 2475754826, %v266
    %v273 = vshrl.u32 2131351028, %v267
    %v274 = vor.u32 %v272, %v273
    %v275 = vshll.u32 2131351028, %v266
    %v276 = vshrl.u32 2102212464, %v267
    %v277 = vor.u32 %v275, %v276
    %v278 = vshll.u32 2102212464, %v266
    %v279 = vshrl.u32 920167782, %v267
    %v280 = vor.u32 %v278, %v279
    %v281 = vshll.u32 920167782, %v266
    %v282 = vshrl.u32 1326507024, %v267
    %v283 = vor.u32 %v281, %v282
    %vm284 = vcmp.lt.s32.totalorder %v265, 1
    %vm285 = vcmp.lt.s32.totalorder %v265, 2
    %vm286 = vcmp.lt.s32.totalorder %v265, 3
    %vm287 = vcmp.lt.s32.totalorder %v265, 4
    %v288 = vsel %vm284, %v268, %v271
    %v289 = vsel %vm287, %v277, 2102212464
    %v290 = vsel %vm286, %v274, %v289
    %v291 = vsel %vm285, %v288, %v290
    %v292 = vsel %vm284, %v271, %v274
    %v293 = vsel %vm287, %v280, 920167782
    %v294 = vsel %vm286, %v277, %v293
    %v295 = vsel %vm285, %v292, %v294
    %v296 = vsel %vm284, %v274, %v277
    %v297 = vsel %vm287, %v283, 1326507024
    %v298 = vsel %vm286, %v280, %v297
    %v299 = vsel %vm285, %v296, %v298
    %v300 = vshll.u32 %v260, 8
    %v301 = vand.u32 %v300, 65535
    %v302 = vshrl.u32 %v300, 16
    %v303 = vand.u32 %v299, 65535
    %v304 = vshrl.u32 %v299, 16
    %v305 = vmul.u32 %v301, %v303
    %v306 = vmul.u32 %v301, %v304
    %v307 = vmul.u32 %v302, %v303
    %v308 = vmul.u32 %v302, %v304
    %v309 = vshll.u32 %v306, 16
    %v310 = vshrl.u32 %v306, 16
    %v311 = vshll.u32 %v307, 16
    %v312 = vshrl.u32 %v307, 16
    %vm313 = vc.u32 %v305, %v309
    %v314 = vsel %vm313, 1, 0
    %v315 = vadd.s32 %v305, %v309
    %v316 = vadd.s32 %v308, %v314
    %vm317 = vc.u32 %v315, %v311
    %v318 = vsel %vm317, 1, 0
    %v319 = vadd.s32 %v315, %v311
    %v320 = vadd.s32 %v316, %v318
    %v321 = vadd.s32 %v320, %v310
    %v322 = vadd.s32 %v321, %v312
    %v323 = vand.u32 %v300, 65535
    %v324 = vshrl.u32 %v300, 16
    %v325 = vand.u32 %v295, 65535
    %v326 = vshrl.u32 %v295, 16
    %v327 = vmul.u32 %v323, %v325
    %v328 = vmul.u32 %v323, %v326
    %v329 = vmul.u32 %v324, %v325
    %v330 = vmul.u32 %v324, %v326
    %v331 = vshll.u32 %v328, 16
    %v332 = vshrl.u32 %v328, 16
    %v333 = vshll.u32 %v329, 16
    %v334 = vshrl.u32 %v329, 16
    %vm335 = vc.u32 %v327, %v331
    %v336 = vsel %vm335, 1, 0
    %v337 = vadd.s32 %v327, %v331
    %v338 = vadd.s32 %v330, %v336
    %vm339 = vc.u32 %v337, %v333
    %v340 = vsel %vm339, 1, 0
    %v341 = vadd.s32 %v337, %v333
    %v342 = vadd.s32 %v338, %v340
    %v343 = vadd.s32 %v342, %v332
    %v344 = vadd.s32 %v343, %v334
    %v345 = vmul.u32 %v300, %v291
    %v346 = vadd.s32 %v322, %v341
    %vm347 = vc.u32 %v322, %v341
    %v348 = vadd.s32 %v344, 1
    %v349 = vsel %vm347, %v348, %v344
    %v350 = vadd.s32 %v345, %v349
    %v351 = vadd.s32 %v350, 536870912
    %v352 = vshrl.u32 %v351, 30
    %v353 = vshll.u32 %v352, 30
    %v354 = vsub.s32 %v350, %v353
    %vm355 = vcmp.lt.s32.totalorder %v354, 0
    %v356 = vsub.s32 0, %v354
    %v357 = vsel %vm355, %v356, %v354
    %v358 = vclz %v357
    %v359 = vsub.s32 %v358, 2
    %vm360 = vcmp.gt.s32.totalorder 0, %v359
    %v361 = vsel %vm360, 0, %v359
    %v362 = vsub.s32 32, %v361
    %v363 = vshll.u32 %v354, %v361
    %v364 = vshrl.u32 %v346, %v362
    %v365 = vor.u32 %v363, %v364
    %v366 = vsub.s32 4294967266, %v361
    %v367 = vadd.s32 %v366, 127
    %v368 = vshll.u32 %v367, 23
    %v369 = vor.u32 4788187, %v368
    %v370 = vand.u32 2147483647, %v369
    %v372 = vcvt.s32.f32 %v365
    %v373 = vmul.f32 %v372, %v370
    %v374 = vxor.u32 %v373, 2147483648
    %v375 = vsel %vm254, %v374, %v373
    %v376 = vsub.s32 4, %v352
    %v377 = vsel %vm254, %v376, %v352
    %v378 = vsel %vm253, %v97, %v375
    %v379 = vsel %vm253, 0, %v377
    %v380 = vmul.f32 %v378, %v378
    %v381 = vmul.f32 %v380, -0.001358992
    %v382 = vadd.f32 %v381, 0.041655596
    %v383 = vmul.f32 %v380, %v382
    %v384 = vadd.f32 %v383, -0.4999988
    %v385 = vmul.f32 %v380, %v384
    %v386 = vadd.f32 1.0, %v385
    %v387 = vmul.f32 %v378, %v378
    %v388 = vmul.f32 %v387, -0.00019511016
    %v389 = vadd.f32 %v388, 0.008332121
    %v390 = vmul.f32 %v387, %v389
    %v391 = vadd.f32 %v390, -0.16666654
    %v392 = vmul.f32 %v387, %v391
    %v393 = vadd.f32 %v392, 1.0
    %v394 = vmul.f32 %v393, %v378
    %vm395 = vweird.f32 %v97
    %v396 = vand.u32 %v379, 3
    %vm397 = vcmp.lt.s32.totalorder %v396, 2
    %vm398 = vcmp.eq.s32.totalorder %v396, 0
    %v399 = vxor.u32 %v394, 2147483648
    %v400 = vsel %vm398, %v386, %v399
    %vm401 = vcmp.eq.s32.totalorder %v396, 2
    %v402 = vxor.u32 %v386, 2147483648
    %v403 = vsel %vm401, %v402, %v394
    %v404 = vsel %vm397, %v400, %v403
    %v405 = vsel %vm395, nan, %v404
    %v406 = vmul.f32 %v94, %v251
    %v407 = vmul.f32 %v95, %v405
    %v408 = vand.u32 2147483647, %v96
    %vm409 = vcmp.le.f32.partialorder %v408, 0.7853982
    %vm410 = vcmp.lt.s32.totalorder %v96, 0
    %v411 = vand.u32 %v96, 2139095040
    %v412 = vshrl.u32 %v411, 23
    %v413 = vsub.s32 %v412, 127
    %v414 = vand.u32 2147483647, %v96
    %v415 = vand.u32 %v414, 8388607
    %v416 = vor.u32 %v415, 8388608
    %v417 = vsub.s32 0, %v416
    %v418 = vadd.s32 %v413, 1
    %vm419 = vcmp.gt.s32.totalorder %v418, 0
    %v420 = vsel %vm419, %v418, 0
    %v421 = vshrl.u32 %v420, 5
    %v422 = vand.u32 %v420, 31
    %v423 = vsub.s32 32, %v422
    %v424 = vshrl.u32 683565275, %v423
    %v425 = vshll.u32 683565275, %v422
    %v426 = vshrl.u32 2475754826, %v423
    %v427 = vor.u32 %v425, %v426
    %v428 = vshll.u32 2475754826, %v422
    %v429 = vshrl.u32 2131351028, %v423
    %v430 = vor.u32 %v428, %v429
    %v431 = vshll.u32 2131351028, %v422
    %v432 = vshrl.u32 2102212464, %v423
    %v433 = vor.u32 %v431, %v432
    %v434 = vshll.u32 2102212464, %v422
    %v435 = vshrl.u32 920167782, %v423
    %v436 = vor.u32 %v434, %v435
    %v437 = vshll.u32 920167782, %v422
    %v438 = vshrl.u32 1326507024, %v423
    %v439 = vor.u32 %v437, %v438
    %vm440 = vcmp.lt.s32.totalorder %v421, 1
    %vm441 = vcmp.lt.s32.totalorder %v421, 2
    %vm442 = vcmp.lt.s32.totalorder %v421, 3
    %vm443 = vcmp.lt.s32.totalorder %v421, 4
    %v444 = vsel %vm440, %v424, %v427
    %v445 = vsel %vm443, %v433, 2102212464
    %v446 = vsel %vm442, %v430, %v445
    %v447 = vsel %vm441, %v444, %v446
    %v448 = vsel %vm440, %v427, %v430
    %v449 = vsel %vm443, %v436, 920167782
    %v450 = vsel %vm442, %v433, %v449
    %v451 = vsel %vm441, %v448, %v450
    %v452 = vsel %vm440, %v430, %v433
    %v453 = vsel %vm443, %v439, 1326507024
    %v454 = vsel %vm442, %v436, %v453
    %v455 = vsel %vm441, %v452, %v454
    %v456 = vshll.u32 %v416, 8
    %v457 = vand.u32 %v456, 65535
    %v458 = vshrl.u32 %v456, 16
    %v459 = vand.u32 %v455, 65535
    %v460 = vshrl.u32 %v455, 16
    %v461 = vmul.u32 %v457, %v459
    %v462 = vmul.u32 %v457, %v460
    %v463 = vmul.u32 %v458, %v459
    %v464 = vmul.u32 %v458, %v460
    %v465 = vshll.u32 %v462, 16
    %v466 = vshrl.u32 %v462, 16
    %v467 = vshll.u32 %v463, 16
    %v468 = vshrl.u32 %v463, 16
    %vm469 = vc.u32 %v461, %v465
    %v470 = vsel %vm469, 1, 0
    %v471 = vadd.s32 %v461, %v465
    %v472 = vadd.s32 %v464, %v470
    %vm473 = vc.u32 %v471, %v467
    %v474 = vsel %vm473, 1, 0
    %v475 = vadd.s32 %v471, %v467
    %v476 = vadd.s32 %v472, %v474
    %v477 = vadd.s32 %v476, %v466
    %v478 = vadd.s32 %v477, %v468
    %v479 = vand.u32 %v456, 65535
    %v480 = vshrl.u32 %v456, 16
    %v481 = vand.u32 %v451, 65535
    %v482 = vshrl.u32 %v451, 16
    %v483 = vmul.u32 %v479, %v481
    %v484 = vmul.u32 %v479, %v482
    %v485 = vmul.u32 %v480, %v481
    %v486 = vmul.u32 %v480, %v482
    %v487 = vshll.u32 %v484, 16
    %v488 = vshrl.u32 %v484, 16
    %v489 = vshll.u32 %v485, 16
    %v490 = vshrl.u32 %v485, 16
    %vm491 = vc.u32 %v483, %v487
    %v492 = vsel %vm491, 1, 0
    %v493 = vadd.s32 %v483, %v487
    %v494 = vadd.s32 %v486, %v492
    %vm495 = vc.u32 %v493, %v489
    %v496 = vsel %vm495, 1, 0
    %v497 = vadd.s32 %v493, %v489
    %v498 = vadd.s32 %v494, %v496
    %v499 = vadd.s32 %v498, %v488
    %v500 = vadd.s32 %v499, %v490
    %v501 = vmul.u32 %v456, %v447
    %v502 = vadd.s32 %v478, %v497
    %vm503 = vc.u32 %v478, %v497
    %v504 = vadd.s32 %v500, 1
    %v505 = vsel %vm503, %v504, %v500
    %v506 = vadd.s32 %v501, %v505
    %v507 = vadd.s32 %v506, 536870912
    %v508 = vshrl.u32 %v507, 30
    %v509 = vshll.u32 %v508, 30
    %v510 = vsub.s32 %v506, %v509
    %vm511 = vcmp.lt.s32.totalorder %v510, 0
    %v512 = vsub.s32 0, %v510
    %v513 = vsel %vm511, %v512, %v510
    %v514 = vclz %v513
    %v515 = vsub.s32 %v514, 2
    %vm516 = vcmp.gt.s32.totalorder 0, %v515
    %v517 = vsel %vm516, 0, %v515
    %v518 = vsub.s32 32, %v517
    %v519 = vshll.u32 %v510, %v517
    %v520 = vshrl.u32 %v502, %v518
    %v521 = vor.u32 %v519, %v520
    %v522 = vsub.s32 4294967266, %v517
    %v523 = vadd.s32 %v522, 127
    %v524 = vshll.u32 %v523, 23
    %v525 = vor.u32 4788187, %v524
    %v526 = vand.u32 2147483647, %v525
    %v528 = vcvt.s32.f32 %v521
    %v529 = vmul.f32 %v528, %v526
    %v530 = vxor.u32 %v529, 2147483648
    %v531 = vsel %vm410, %v530, %v529
    %v532 = vsub.s32 4, %v508
    %v533 = vsel %vm410, %v532, %v508
    %v534 = vsel %vm409, %v96, %v531
    %v535 = vsel %vm409, 0, %v533
    %v536 = vmul.f32 %v534, %v534
    %v537 = vmul.f32 %v536, -0.001358992
    %v538 = vadd.f32 %v537, 0.041655596
    %v539 = vmul.f32 %v536, %v538
    %v540 = vadd.f32 %v539, -0.4999988
    %v541 = vmul.f32 %v536, %v540
    %v542 = vadd.f32 1.0, %v541
    %v543 = vmul.f32 %v534, %v534
    %v544 = vmul.f32 %v543, -0.00019511016
    %v545 = vadd.f32 %v544, 0.008332121
    %v546 = vmul.f32 %v543, %v545
    %v547 = vadd.f32 %v546, -0.16666654
    %v548 = vmul.f32 %v543, %v547
    %v549 = vadd.f32 %v548, 1.0
    %v550 = vmul.f32 %v549, %v534
    %vm551 = vweird.f32 %v96
    %v552 = vadd.s32 %v535, 3
    %v553 = vand.u32 %v552, 3
    %vm554 = vcmp.lt.s32.totalorder %v553, 2
    %vm555 = vcmp.eq.s32.totalorder %v553, 0
    %v556 = vxor.u32 %v550, 2147483648
    %v557 = vsel %vm555, %v542, %v556
    %vm558 = vcmp.eq.s32.totalorder %v553, 2
    %v559 = vxor.u32 %v542, 2147483648
    %v560 = vsel %vm558, %v559, %v550
    %v561 = vsel %vm554, %v557, %v560
    %v562 = vsel %vm551, nan, %v561
    %v563 = vand.u32 2147483647, %v97
    %vm564 = vcmp.le.f32.partialorder %v563, 0.7853982
    %vm565 = vcmp.lt.s32.totalorder %v97, 0
    %v566 = vand.u32 %v97, 2139095040
    %v567 = vshrl.u32 %v566, 23
    %v568 = vsub.s32 %v567, 127
    %v569 = vand.u32 2147483647, %v97
    %v570 = vand.u32 %v569, 8388607
    %v571 = vor.u32 %v570, 8388608
    %v572 = vsub.s32 0, %v571
    %v573 = vadd.s32 %v568, 1
    %vm574 = vcmp.gt.s32.totalorder %v573, 0
    %v575 = vsel %vm574, %v573, 0
    %v576 = vshrl.u32 %v575, 5
    %v577 = vand.u32 %v575, 31
    %v578 = vsub.s32 32, %v577
    %v579 = vshrl.u32 683565275, %v578
    %v580 = vshll.u32 683565275, %v577
    %v581 = vshrl.u32 2475754826, %v578
    %v582 = vor.u32 %v580, %v581
    %v583 = vshll.u32 2475754826, %v577
    %v584 = vshrl.u32 2131351028, %v578
    %v585 = vor.u32 %v583, %v584
    %v586 = vshll.u32 2131351028, %v577
    %v587 = vshrl.u32 2102212464, %v578
    %v588 = vor.u32 %v586, %v587
    %v589 = vshll.u32 2102212464, %v577
    %v590 = vshrl.u32 920167782, %v578
    %v591 = vor.u32 %v589, %v590
    %v592 = vshll.u32 920167782, %v577
    %v593 = vshrl.u32 1326507024, %v578
    %v594 = vor.u32 %v592, %v593
    %vm595 = vcmp.lt.s32.totalorder %v576, 1
    %vm596 = vcmp.lt.s32.totalorder %v576, 2
    %vm597 = vcmp.lt.s32.totalorder %v576, 3
    %vm598 = vcmp.lt.s32.totalorder %v576, 4
    %v599 = vsel %vm595, %v579, %v582
    %v600 = vsel %vm598, %v588, 2102212464
    %v601 = vsel %vm597, %v585, %v600
    %v602 = vsel %vm596, %v599, %v601
    %v603 = vsel %vm595, %v582, %v585
    %v604 = vsel %vm598, %v591, 920167782
    %v605 = vsel %vm597, %v588, %v604
    %v606 = vsel %vm596, %v603, %v605
    %v607 = vsel %vm595, %v585, %v588
    %v608 = vsel %vm598, %v594, 1326507024
    %v609 = vsel %vm597, %v591, %v608
    %v610 = vsel %vm596, %v607, %v609
    %v611 = vshll.u32 %v571, 8
    %v612 = vand.u32 %v611, 65535
    %v613 = vshrl.u32 %v611, 16
    %v614 = vand.u32 %v610, 65535
    %v615 = vshrl.u32 %v610, 16
    %v616 = vmul.u32 %v612, %v614
    %v617 = vmul.u32 %v612, %v615
    %v618 = vmul.u32 %v613, %v614
    %v619 = vmul.u32 %v613, %v615
    %v620 = vshll.u32 %v617, 16
    %v621 = vshrl.u32 %v617, 16
    %v622 = vshll.u32 %v618, 16
    %v623 = vshrl.u32 %v618, 16
    %vm624 = vc.u32 %v616, %v620
    %v625 = vsel %vm624, 1, 0
    %v626 = vadd.s32 %v616, %v620
    %v627 = vadd.s32 %v619, %v625
    %vm628 = vc.u32 %v626, %v622
    %v629 = vsel %vm628, 1, 0
    %v630 = vadd.s32 %v626, %v622
    %v631 = vadd.s32 %v627, %v629
    %v632 = vadd.s32 %v631, %v621
    %v633 = vadd.s32 %v632, %v623
    %v634 = vand.u32 %v611, 65535
    %v635 = vshrl.u32 %v611, 16
    %v636 = vand.u32 %v606, 65535
    %v637 = vshrl.u32 %v606, 16
    %v638 = vmul.u32 %v634, %v636
    %v639 = vmul.u32 %v634, %v637
    %v640 = vmul.u32 %v635, %v636
    %v641 = vmul.u32 %v635, %v637
    %v642 = vshll.u32 %v639, 16
    %v643 = vshrl.u32 %v639, 16
    %v644 = vshll.u32 %v640, 16
    %v645 = vshrl.u32 %v640, 16
    %vm646 = vc.u32 %v638, %v642
    %v647 = vsel %vm646, 1, 0
    %v648 = vadd.s32 %v638, %v642
    %v649 = vadd.s32 %v641, %v647
    %vm650 = vc.u32 %v648, %v644
    %v651 = vsel %vm650, 1, 0
    %v652 = vadd.s32 %v648, %v644
    %v653 = vadd.s32 %v649, %v651
    %v654 = vadd.s32 %v653, %v643
    %v655 = vadd.s32 %v654, %v645
    %v656 = vmul.u32 %v611, %v602
    %v657 = vadd.s32 %v633, %v652
    %vm658 = vc.u32 %v633, %v652
    %v659 = vadd.s32 %v655, 1
    %v660 = vsel %vm658, %v659, %v655
    %v661 = vadd.s32 %v656, %v660
    %v662 = vadd.s32 %v661, 536870912
    %v663 = vshrl.u32 %v662, 30
    %v664 = vshll.u32 %v663, 30
    %v665 = vsub.s32 %v661, %v664
    %vm666 = vcmp.lt.s32.totalorder %v665, 0
    %v667 = vsub.s32 0, %v665
    %v668 = vsel %vm666, %v667, %v665
    %v669 = vclz %v668
    %v670 = vsub.s32 %v669, 2
    %vm671 = vcmp.gt.s32.totalorder 0, %v670
    %v672 = vsel %vm671, 0, %v670
    %v673 = vsub.s32 32, %v672
    %v674 = vshll.u32 %v665, %v672
    %v675 = vshrl.u32 %v657, %v673
    %v676 = vor.u32 %v674, %v675
    %v677 = vsub.s32 4294967266, %v672
    %v678 = vadd.s32 %v677, 127
    %v679 = vshll.u32 %v678, 23
    %v680 = vor.u32 4788187, %v679
    %v681 = vand.u32 2147483647, %v680
    %v683 = vcvt.s32.f32 %v676
    %v684 = vmul.f32 %v683, %v681
    %v685 = vxor.u32 %v684, 2147483648
    %v686 = vsel %vm565, %v685, %v684
    %v687 = vsub.s32 4, %v663
    %v688 = vsel %vm565, %v687, %v663
    %v689 = vsel %vm564, %v97, %v686
    %v690 = vsel %vm564, 0, %v688
    %v691 = vmul.f32 %v689, %v689
    %v692 = vmul.f32 %v691, -0.001358992
    %v693 = vadd.f32 %v692, 0.041655596
    %v694 = vmul.f32 %v691, %v693
    %v695 = vadd.f32 %v694, -0.4999988
    %v696 = vmul.f32 %v691, %v695
    %v697 = vadd.f32 1.0, %v696
    %v698 = vmul.f32 %v689, %v689
    %v699 = vmul.f32 %v698, -0.00019511016
    %v700 = vadd.f32 %v699, 0.008332121
    %v701 = vmul.f32 %v698, %v700
    %v702 = vadd.f32 %v701, -0.16666654
    %v703 = vmul.f32 %v698, %v702
    %v704 = vadd.f32 %v703, 1.0
    %v705 = vmul.f32 %v704, %v689
    %vm706 = vweird.f32 %v97
    %v707 = vadd.s32 %v690, 3
    %v708 = vand.u32 %v707, 3
    %vm709 = vcmp.lt.s32.totalorder %v708, 2
    %vm710 = vcmp.eq.s32.totalorder %v708, 0
    %v711 = vxor.u32 %v705, 2147483648
    %v712 = vsel %vm710, %v697, %v711
    %vm713 = vcmp.eq.s32.totalorder %v708, 2
    %v714 = vxor.u32 %v697, 2147483648
    %v715 = vsel %vm713, %v714, %v705
    %v716 = vsel %vm709, %v712, %v715
    %v717 = vsel %vm706, nan, %v716
    %v718 = vmul.f32 %v94, %v562
    %v719 = vmul.f32 %v95, %v717
    %v720 = vld [vmem:[#allocation2] sm:$0xff]
    %v721 = vld [vmem:[#allocation2 + $0x8] sm:$0xff]
    %v722 = vld [vmem:[#allocation2 + $0x10] sm:$0xff]
    %v723 = vld [vmem:[#allocation2 + $0x18] sm:$0xff]
    %v724 = vadd.f32 %v720, %v406
    %v725 = vadd.f32 %v721, %v407
    %v726 = vadd.f32 %v722, %v718
    %v727 = vadd.f32 %v723, %v719
    %728 = vst [vmem:[#allocation5] sm:$0xff] %v724
    %729 = vst [vmem:[#allocation5 + $0x8] sm:$0xff] %v725
    %730 = vst [vmem:[#allocation5 + $0x10] sm:$0xff] %v726
    %731 = vst [vmem:[#allocation5 + $0x18] sm:$0xff] %v727
    // Predicated region
    $region14: #{tpu_custom_call.1} parent=1 // pred_check
      _
    $region15: #{tpu_custom_call.1} parent=1 // pred_check_branch
      %733 = sbr.rel (0) target = $region17
    $region16: #{tpu_custom_call.1} parent=1 // pred_region
      %735 = vsyncadd [#allocation4], 0
      %s737 = sshll.u32 [#allocation5], 4
      %s738 = int_to_ptr.vmem [resolvable:$true] %s737
      %s739 = sshll.u32 %s2, 4
      %s740 = int_to_ptr.hbm [resolvable:$true] %s739
      %742 = dma.vmem_to_hbm [thread:$0]  %s738, 512, %s740, [#allocation4]
    $region17: #{tpu_custom_call.1} parent=1 // pred_fallthru
      _
    // Predicated region
    $region18: #{tpu_custom_call.1} parent=1 // pred_check
      _
    $region19: #{tpu_custom_call.1} parent=1 // pred_check_branch
      %744 = sbr.rel (0) target = $region21
    $region20: #{tpu_custom_call.1} parent=1 // pred_region
      %746 = dma.done [#allocation4], 512
    $region21: #{tpu_custom_call.1} parent=1 // pred_fallthru
      _
    %747 = vsyncpa [#allocation3], 1
    %748 = vsyncpa [#allocation4], 1

</llo_original>
